<compile_context>
chip_gen: v7x
topology: tpu7x:2x2x1
jax: 0.10.0
libtpu: 0.0.40
codegen_flags: <defaults>
</compile_context>

<pallas_src>
import functools

import jax
import jax.numpy as jnp
from jax.experimental import pallas as pl
from jax.experimental.pallas import tpu as pltpu


def _dice_sums_kernel(x_ref, t_ref, out_ref, *, apply_softmax, hw, tm, j_shard):
    """One (C, TM) tile of the per-class reduction.

    x_ref  : (C, TM)  scores for one image tile (class axis on sublanes)
    t_ref  : (1, TM)  int32 class labels for the same tile
    out_ref: (3, C)   resident accumulator, rows = [intersect, z_sum, y_sum]
    """
    n = pl.program_id(1)   # image index
    j = pl.program_id(2)   # tile index within this shard

    @pl.when(jnp.logical_and(n == 0, j == 0))
    def _init():
        out_ref[...] = jnp.zeros_like(out_ref)

    x = x_ref[...].astype(jnp.float32)                  # (C, TM)
    t = t_ref[...]                                      # (1, TM) int32
    C = x.shape[0]

    if apply_softmax:
        # Softmax over the class axis (dim=1 of NCHW). C lives entirely inside
        # the tile, so this is a cheap sublane reduction; reciprocal goes to EUP.
        m = jnp.max(x, axis=0, keepdims=True)
        e = jnp.exp(x - m)
        denom = jnp.sum(e, axis=0, keepdims=True)
        x = e * pl.reciprocal(denom, approx=True)

    # One-hot via int compare (robust + pure VPU).
    cls = jax.lax.broadcasted_iota(jnp.int32, (C, tm), 0)
    onehot = (cls == t).astype(jnp.float32)             # (C, TM)

    if hw % tm != 0:
        # Mask lanes past the end of the flattened spatial axis (partial tile).
        tile_idx = pl.program_id(0) * j_shard + j
        lane = jax.lax.broadcasted_iota(jnp.int32, (1, tm), 1)
        valid = (tile_idx * tm + lane) < hw             # (1, TM) bool
        x = jnp.where(valid, x, 0.0)
        onehot = jnp.where(valid, onehot, 0.0)

    intersect = jnp.sum(x * onehot, axis=1)             # (C,)
    z_sum = jnp.sum(x * x, axis=1)                      # (C,)
    y_sum = jnp.sum(onehot, axis=1)                     # onehot^2 == onehot

    out_ref[...] += jnp.stack([intersect, z_sum, y_sum], axis=0)


def dice_loss(inputs, target, n_classes, weight=None, softmax=False, tile_m=None):
    """Matches DiceLoss.forward: mean over classes of weighted per-class dice loss."""
    N, C, H, W = inputs.shape
    assert C == n_classes, f"predict C={C} & n_classes={n_classes} do not match"
    HW = H * W

    # Free reshapes only (no transpose / no extra HBM pass).
    x = inputs.reshape(N, C, HW)
    t = target.reshape(N, 1, HW).astype(jnp.int32)

    # Tile size on the flattened spatial axis: biggest multiple of 128 keeping
    # the double-buffered (scores + labels) tiles under ~8 MiB of VMEM.
    if tile_m is None:
        budget = 8 * 1024 * 1024
        tm_cap = max(512, min(32768, (budget // (2 * (C + 1) * 4) // 128) * 128))
    else:
        assert tile_m % 128 == 0 or tile_m >= HW, "tile_m must be a multiple of 128"
        tm_cap = tile_m
    TM = HW if HW <= tm_cap else tm_cap
    J = pl.cdiv(HW, TM)                                 # tiles per image

    # Leading 'parallel' shard axis: on v7x this splits the reduction across the
    # two TensorCores (each writes its own (3, C) slab); no-op on v5e/v6e.
    num_shards = 2 if J % 2 == 0 else 1
    j_shard = J // num_shards

    kernel = functools.partial(
        _dice_sums_kernel, apply_softmax=softmax, hw=HW, tm=TM, j_shard=j_shard)

    sums = pl.pallas_call(
        kernel,
        out_shape=jax.ShapeDtypeStruct((num_shards, 3, C), jnp.float32),
        grid=(num_shards, N, j_shard),
        in_specs=[
            pl.BlockSpec((None, C, TM), lambda p, n, j: (n, 0, p * j_shard + j)),
            pl.BlockSpec((None, 1, TM), lambda p, n, j: (n, 0, p * j_shard + j)),
        ],
        out_specs=pl.BlockSpec((None, 3, C), lambda p, n, j: (p, 0, 0)),
        compiler_params=pltpu.CompilerParams(
            dimension_semantics=("parallel", "arbitrary", "arbitrary"),
            vmem_limit_bytes=32 * 1024 * 1024,
        ),
    )(x, t)

    intersect, z_sum, y_sum = jnp.sum(sums, axis=0)     # (3, C) -> three (C,)
    smooth = 1e-05
    dice_coeff = (2.0 * intersect + smooth) / (z_sum + y_sum + smooth)
    per_class_loss = 1.0 - dice_coeff                   # == _dice_loss(score, target)

    if weight is None:
        weight = jnp.ones((n_classes,), jnp.float32)
    else:
        weight = jnp.asarray(weight, jnp.float32)
    return jnp.sum(per_class_loss * weight) / n_classes


def _dice_loss_ref(inputs, target, n_classes, weight=None, softmax=False):
    """Pure-JAX reference mirroring the PyTorch module (sanity check)."""
    if softmax:
        inputs = jax.nn.softmax(inputs, axis=1)
    onehot = jnp.stack([(target == i) for i in range(n_classes)], axis=1).astype(jnp.float32)
    if weight is None:
        weight = [1.0] * n_classes
    smooth = 1e-05
    loss = 0.0
    for i in range(n_classes):
        s = inputs[:, i]
        tg = onehot[:, i]
        intersect = jnp.sum(s * tg)
        y_sum = jnp.sum(tg * tg)
        z_sum = jnp.sum(s * s)
        d = 1.0 - (2 * intersect + smooth) / (z_sum + y_sum + smooth)
        loss = loss + d * weight[i]
    return loss / n_classes


if __name__ == "__main__":
    key = jax.random.PRNGKey(0)
    k1, k2, k3, k4, k5, k6 = jax.random.split(key, 6)

    # --- test A: small NCHW, single-tile path, no softmax ---
    N, C, H, W = 2, 4, 16, 16
    inputs = jax.nn.softmax(jax.random.normal(k1, (N, C, H, W), jnp.float32), axis=1)
    target = jax.random.randint(k2, (N, H, W), 0, C)
    loss = dice_loss(inputs, target, n_classes=C)
    jax.block_until_ready(loss)
    ref = _dice_loss_ref(inputs, target, C)
    assert jnp.allclose(loss, ref, rtol=1e-5, atol=1e-6), (loss, ref)

    # --- test B: tiled + 2-way sharded reduction, class weights ---
    Nb, Cb, Hb, Wb = 2, 3, 64, 64
    inputs_b = jax.nn.softmax(jax.random.normal(k3, (Nb, Cb, Hb, Wb), jnp.float32), axis=1)
    target_b = jax.random.randint(k4, (Nb, Hb, Wb), 0, Cb)
    wgt = [0.2, 0.3, 0.5]
    loss_b = dice_loss(inputs_b, target_b, n_classes=Cb, weight=wgt, tile_m=512)
    ref_b = _dice_loss_ref(inputs_b, target_b, Cb, weight=wgt)
    assert jnp.allclose(loss_b, ref_b, rtol=1e-4, atol=1e-5), (loss_b, ref_b)

    # --- test C: partial-tile masking + in-kernel softmax (approx reciprocal) ---
    Nc, Cc, Hc, Wc = 1, 5, 23, 37
    logits_c = jax.random.normal(k5, (Nc, Cc, Hc, Wc), jnp.float32)
    target_c = jax.random.randint(k6, (Nc, Hc, Wc), 0, Cc)
    loss_c = dice_loss(logits_c, target_c, n_classes=Cc, softmax=True, tile_m=256)
    ref_c = _dice_loss_ref(logits_c, target_c, Cc, softmax=True)
    assert jnp.allclose(loss_c, ref_c, rtol=5e-3, atol=1e-4), (loss_c, ref_c)

    jax.block_until_ready((loss, loss_b, loss_c))
    print("KERNEL_OK")
</pallas_src>

<mosaic_0001>
module attributes {stable_mosaic.version = 11 : i64} {
  func.func @_dice_sums_kernel(%arg0: i32, %arg1: i32, %arg2: i32, %arg3: memref<1x4x256xf32, #tpu.memory_space<vmem>>, %arg4: memref<1x1x256xi32, #tpu.memory_space<vmem>>, %arg5: memref<1x3x4xf32, #tpu.memory_space<vmem>>) attributes {dimension_semantics = [#tpu.dimension_semantics<parallel>, #tpu.dimension_semantics<arbitrary>, #tpu.dimension_semantics<arbitrary>], iteration_bounds = array<i64: 1, 2, 1>, scalar_prefetch = 0 : i64, scratch_operands = 0 : i64, tpu.core_type = #tpu.core_type<tc>, window_params = [{transform_indices = @transform_0, window_bounds = array<i64: 1, 4, 256>}, {transform_indices = @transform_1, window_bounds = array<i64: 1, 1, 256>}, {transform_indices = @transform_2, window_bounds = array<i64: 1, 3, 4>}]} {
    %c0_i32 = arith.constant 0 : i32
    %0 = arith.cmpi eq, %arg1, %c0_i32 : i32
    %c0_i32_0 = arith.constant 0 : i32
    %1 = arith.cmpi eq, %arg2, %c0_i32_0 : i32
    %2 = arith.andi %0, %1 : i1
    %3 = arith.extui %2 : i1 to i32
    %c0_i32_1 = arith.constant 0 : i32
    %4 = arith.cmpi ne, %3, %c0_i32_1 : i32
    scf.if %4 {
      %cst_15 = arith.constant 0.000000e+00 : f32
      %29 = vector.broadcast %cst_15 : f32 to vector<3x4xf32>
      %c0_16 = arith.constant 0 : index
      %c0_17 = arith.constant 0 : index
      %c0_18 = arith.constant 0 : index
      %30 = vector.load %arg5[%c0_16, %c0_17, %c0_18] : memref<1x3x4xf32, #tpu.memory_space<vmem>>, vector<1x3x4xf32>
      %31 = vector.shape_cast %30 : vector<1x3x4xf32> to vector<3x4xf32>
      %32 = vector.shape_cast %29 : vector<3x4xf32> to vector<1x3x4xf32>
      tpu.vector_store %arg5[%c0_16, %c0_17, %c0_18], %32 {strides = array<i32>} : memref<1x3x4xf32, #tpu.memory_space<vmem>>, vector<1x3x4xf32>,
    } else {
    }
    %c0 = arith.constant 0 : index
    %c0_2 = arith.constant 0 : index
    %c0_3 = arith.constant 0 : index
    %5 = vector.load %arg3[%c0, %c0_2, %c0_3] : memref<1x4x256xf32, #tpu.memory_space<vmem>>, vector<1x4x256xf32>
    %6 = vector.shape_cast %5 : vector<1x4x256xf32> to vector<4x256xf32>
    %c0_4 = arith.constant 0 : index
    %c0_5 = arith.constant 0 : index
    %c0_6 = arith.constant 0 : index
    %7 = vector.load %arg4[%c0_4, %c0_5, %c0_6] : memref<1x1x256xi32, #tpu.memory_space<vmem>>, vector<1x1x256xi32>
    %8 = vector.shape_cast %7 : vector<1x1x256xi32> to vector<1x256xi32>
    %9 = tpu.iota {dimensions = array<i32: 0>} : vector<4x256xi32>
    %10 = vector.broadcast %8 : vector<1x256xi32> to vector<4x256xi32>
    %11 = arith.cmpi eq, %9, %10 : vector<4x256xi32>
    %12 = arith.extui %11 : vector<4x256xi1> to vector<4x256xi32>
    %13 = arith.sitofp %12 : vector<4x256xi32> to vector<4x256xf32>
    %14 = arith.mulf %6, %13 : vector<4x256xf32>
    %cst = arith.constant dense<0.000000e+00> : vector<4xf32>
    %15 = vector.multi_reduction <add>, %14, %cst [1] : vector<4x256xf32> to vector<4xf32>
    %16 = arith.mulf %6, %6 : vector<4x256xf32>
    %cst_7 = arith.constant dense<0.000000e+00> : vector<4xf32>
    %17 = vector.multi_reduction <add>, %16, %cst_7 [1] : vector<4x256xf32> to vector<4xf32>
    %cst_8 = arith.constant dense<0.000000e+00> : vector<4xf32>
    %18 = vector.multi_reduction <add>, %13, %cst_8 [1] : vector<4x256xf32> to vector<4xf32>
    %c0_9 = arith.constant 0 : index
    %c0_10 = arith.constant 0 : index
    %c0_11 = arith.constant 0 : index
    %19 = vector.load %arg5[%c0_9, %c0_10, %c0_11] : memref<1x3x4xf32, #tpu.memory_space<vmem>>, vector<1x3x4xf32>
    %20 = vector.shape_cast %19 : vector<1x3x4xf32> to vector<3x4xf32>
    %21 = vector.shape_cast %15 : vector<4xf32> to vector<1x4xf32>
    %22 = vector.shape_cast %17 : vector<4xf32> to vector<1x4xf32>
    %23 = vector.shape_cast %18 : vector<4xf32> to vector<1x4xf32>
    %24 = tpu.concatenate %21, %22, %23 in 0 : vector<1x4xf32>, vector<1x4xf32>, vector<1x4xf32> -> vector<3x4xf32>
    %25 = arith.addf %20, %24 : vector<3x4xf32>
    %c0_12 = arith.constant 0 : index
    %c0_13 = arith.constant 0 : index
    %c0_14 = arith.constant 0 : index
    %26 = vector.load %arg5[%c0_12, %c0_13, %c0_14] : memref<1x3x4xf32, #tpu.memory_space<vmem>>, vector<1x3x4xf32>
    %27 = vector.shape_cast %26 : vector<1x3x4xf32> to vector<3x4xf32>
    %28 = vector.shape_cast %25 : vector<3x4xf32> to vector<1x3x4xf32>
    tpu.vector_store %arg5[%c0_12, %c0_13, %c0_14], %28 {strides = array<i32>} : memref<1x3x4xf32, #tpu.memory_space<vmem>>, vector<1x3x4xf32>,
    return
  }
  func.func @transform_0(%arg0: i32, %arg1: i32, %arg2: i32) -> (i32, i32, i32) {
    %c1_i32 = arith.constant 1 : i32
    %0 = arith.muli %arg0, %c1_i32 : i32
    %1 = arith.addi %0, %arg2 : i32
    %c0_i32 = arith.constant 0 : i32
    %c0_i32_0 = arith.constant 0 : i32
    return %arg1, %c0_i32, %1 : i32, i32, i32
  }
  func.func @transform_1(%arg0: i32, %arg1: i32, %arg2: i32) -> (i32, i32, i32) {
    %c1_i32 = arith.constant 1 : i32
    %0 = arith.muli %arg0, %c1_i32 : i32
    %1 = arith.addi %0, %arg2 : i32
    %c0_i32 = arith.constant 0 : i32
    %c0_i32_0 = arith.constant 0 : i32
    return %arg1, %c0_i32, %1 : i32, i32, i32
  }
  func.func @transform_2(%arg0: i32, %arg1: i32, %arg2: i32) -> (i32, i32, i32) {
    %c0_i32 = arith.constant 0 : i32
    %c0_i32_0 = arith.constant 0 : i32
    %c0_i32_1 = arith.constant 0 : i32
    return %arg0, %c0_i32, %c0_i32_0 : i32, i32, i32
  }
}

</mosaic_0001>

<llo_original>
// kernel: tpu_custom_call.1
$region0: #{tpu_custom_call.1}
  #allocation0 [shape = 'u32[]', space=smem, size = 0x4, offset = 0x4, fixed_abs, tag = 'smem constant byte address 0x4 - core index']
  #allocation1 [shape = 'u32[144,128]{1,0:T(1,128)}', space=vmem, size = 0x12000, scoped, tag = 'internal scratch']
  %s0 = inlined_call_operand.hbm [shape: f32[2,4,256], index: 0, kind: input, shape index: {}]
  %s1 = inlined_call_operand.hbm [shape: s32[2,1,256], index: 1, kind: input, shape index: {}]
  %s2 = inlined_call_operand.vmem [shape: f32[1,3,4], index: 2, kind: output, shape index: {}]
  %s3 = sld [smem:[#allocation0]]
  $region53: #{tpu_custom_call.1} parent=0
    _
  %s5 = ssub.s32 1, %s3
  %s6 = scalar_select 0, %s5, %s3
  $region1: #{tpu_custom_call.1} parent=0
    #allocation2 [shape = 'u8[8192]{0}', space=vmem, size = 0x2000, scoped, tag = 'input window, operand 0']
    #allocation3 [shape = 's32[2]{0}', space=sflag, size = 0x8, scoped, tag = 'scoped memory for tpu_custom_call.1']
    #allocation4 [shape = 'u8[2048]{0}', space=vmem, size = 0x800, scoped, tag = 'input window, operand 1']
    #allocation5 [shape = 's32[2]{0}', space=sflag, size = 0x8, scoped, tag = 'scoped memory for tpu_custom_call.1']
    %7 = vsyncpa [#allocation3], 0
    %s8 = scalar_lea.sflag [#allocation3], 1
    %9 = vsyncpa %s8, 0
    %10 = vsyncpa [#allocation5], 0
    %s11 = scalar_lea.sflag [#allocation5], 1
    %12 = vsyncpa %s11, 0
    loop: start=0, step=1, limit=4
    $region2: #{tpu_custom_call.1} parent=1 // loop_pre_header
      _
    $region3: #{tpu_custom_call.1} parent=1 // loop_header
      %s14 = sphi 0, %s18
      %p15 = scmp.ge.s32.totalorder %s14, 4
      %s21 = sphi 0, %s40
      %s22 = sphi 0, %s36
      %s23 = sphi 0, %s32
      %s24 = sphi 0, %s21
      %s25 = sphi 0, %s22
      %s26 = sphi 0, %s23
      %s27 = sphi 0, %s24
      %s28 = sphi 0, %s25
      %s29 = sphi 0, %s26
      %s47 = sphi 0, %s49
      %s50 = sphi 0, %s47
      %s51 = sphi 0, %s50
      %s67 = sphi 0, %s51
      %s77 = sphi 0, %s79
      %s80 = sphi 0, %s77
      %s81 = sphi 0, %s80
      %s97 = sphi 0, %s81
      %s103 = sphi 0, %s105
      %s106 = sphi 0, %s103
      %s107 = sphi 0, %s106
      %s123 = sphi 0, %s107
    $region4: #{tpu_custom_call.1} parent=1 // loop_header_branch
      %17 = sbr.rel (%p15) target = $region8
    $region5: #{tpu_custom_call.1} parent=1 // loop_body
      %s19 = ssub.s32 %s14, 1
      %s20 = ssub.s32 %s14, 2
      %s30 = sadd.s32 1, %s23
      %p31 = scmp.ge.s32.totalorder %s30, 1
      %s32 = scalar_select %p31, 0, %s30
      %s33 = sadd.s32 1, %s22
      %s34 = scalar_select %p31, %s33, %s22
      %p35 = scmp.ge.s32.totalorder %s34, 2
      %s36 = scalar_select %p35, 0, %s34
      %s37 = sadd.s32 1, %s21
      %s38 = scalar_select %p35, %s37, %s21
      %p39 = scmp.ge.s32.totalorder %s38, 1
      %s40 = scalar_select %p39, 0, %s38
      %s41 = sadd.s32 %s21, %s23
      %s42 = sadd.s32 %s40, %s32
      %s43 = ssub.s32 %s22, %s36
      %s44 = ssub.s32 %s41, %s42
      %s45 = sor.u32 %s43, %s44
      %p46 = scmp.eq.s32.totalorder %s45, 0
      %s48 = sadd.s32 %s47, 1
      %s49 = scalar_select %p46, %s47, %s48
      %p52 = pneg %p46
      %p53 = scmp.eq.s32.totalorder %s14, 1
      %p54 = por %p52, %p53
      %p55 = scmp.ne.s32.totalorder %s47, %s50
      %p56 = scmp.eq.s32.totalorder %s14, 0
      %p57 = por %p55, %p56
      %p58 = scmp.ne.s32.totalorder %s47, %s50
      %p59 = scmp.eq.s32.totalorder %s19, 1
      %p60 = por %p58, %p59
      %p61 = scmp.ne.s32.totalorder %s50, %s51
      %p62 = scmp.eq.s32.totalorder %s19, 0
      %p63 = por %p61, %p62
      %p64 = scmp.ne.s32.totalorder %s50, %s51
      %p65 = scmp.eq.s32.totalorder %s20, 1
      %p66 = por %p64, %p65
      %p68 = scmp.ne.s32.totalorder %s51, %s67
      %p69 = scmp.eq.s32.totalorder %s20, 0
      %p70 = por %p68, %p69
      %s71 = sadd.s32 %s21, %s23
      %s72 = sadd.s32 %s40, %s32
      %s73 = ssub.s32 %s22, %s36
      %s74 = ssub.s32 %s71, %s72
      %s75 = sor.u32 %s73, %s74
      %p76 = scmp.eq.s32.totalorder %s75, 0
      %s78 = sadd.s32 %s77, 1
      %s79 = scalar_select %p76, %s77, %s78
      %p82 = pneg %p76
      %p83 = scmp.eq.s32.totalorder %s14, 1
      %p84 = por %p82, %p83
      %p85 = scmp.ne.s32.totalorder %s77, %s80
      %p86 = scmp.eq.s32.totalorder %s14, 0
      %p87 = por %p85, %p86
      %p88 = scmp.ne.s32.totalorder %s77, %s80
      %p89 = scmp.eq.s32.totalorder %s19, 1
      %p90 = por %p88, %p89
      %p91 = scmp.ne.s32.totalorder %s80, %s81
      %p92 = scmp.eq.s32.totalorder %s19, 0
      %p93 = por %p91, %p92
      %p94 = scmp.ne.s32.totalorder %s80, %s81
      %p95 = scmp.eq.s32.totalorder %s20, 1
      %p96 = por %p94, %p95
      %p98 = scmp.ne.s32.totalorder %s81, %s97
      %p99 = scmp.eq.s32.totalorder %s20, 0
      %p100 = por %p98, %p99
      %s101 = ssub.s32 %s21, %s40
      %p102 = scmp.eq.s32.totalorder %s101, 0
      %s104 = sadd.s32 %s103, 1
      %s105 = scalar_select %p102, %s103, %s104
      %p108 = pneg %p102
      %p109 = scmp.eq.s32.totalorder %s14, 1
      %p110 = por %p108, %p109
      %p111 = scmp.ne.s32.totalorder %s103, %s106
      %p112 = scmp.eq.s32.totalorder %s14, 0
      %p113 = por %p111, %p112
      %p114 = scmp.ne.s32.totalorder %s103, %s106
      %p115 = scmp.eq.s32.totalorder %s19, 1
      %p116 = por %p114, %p115
      %p117 = scmp.ne.s32.totalorder %s106, %s107
      %p118 = scmp.eq.s32.totalorder %s19, 0
      %p119 = por %p117, %p118
      %p120 = scmp.ne.s32.totalorder %s106, %s107
      %p121 = scmp.eq.s32.totalorder %s20, 1
      %p122 = por %p120, %p121
      %p124 = scmp.ne.s32.totalorder %s107, %s123
      %p125 = scmp.eq.s32.totalorder %s20, 0
      %p126 = por %p124, %p125
      %p127 = scmp.le.s32.totalorder 1, %s14
      %p128 = scmp.lt.s32.totalorder %s14, 3
      %p129 = pnand %p127, %p128
      %p130 = pneg %p129
      // Predicated region
      $region9: #{tpu_custom_call.1} parent=5 // pred_check
        _
      $region10: #{tpu_custom_call.1} parent=5 // pred_check_branch
        %132 = sbr.rel (%p129) target = $region12
      $region11: #{tpu_custom_call.1} parent=5 // pred_region
        %s133 = ssub.s32 %s14, 1
      $region12: #{tpu_custom_call.1} parent=5 // pred_fallthru
        _
      %p134 = scmp.lt.s32.totalorder %s14, 2
      // Predicated region
      $region13: #{tpu_custom_call.1} parent=5 // pred_check
        %p135 = pneg %p134
      $region14: #{tpu_custom_call.1} parent=5 // pred_check_branch
        %137 = sbr.rel (%p135) target = $region16
      $region15: #{tpu_custom_call.1} parent=5 // pred_region
        // Predicated region
        $region17: #{tpu_custom_call.1} parent=15 // pred_check
          %p138 = pneg %p57
        $region18: #{tpu_custom_call.1} parent=15 // pred_check_branch
          %140 = sbr.rel (%p138) target = $region20
        $region19: #{tpu_custom_call.1} parent=15 // pred_region
          %s141 = sand.u32 %s47, 1
          %s142 = scalar_lea.sflag [#allocation3], %s141
          %s143 = sand.u32 %s47, 1
          %s144 = smul.addr %s143, 8
          %s145 = scalar_lea.vmem [#allocation2], %s144
          %s146 = sadd.s32 %s21, %s23
          %s147 = smul.u32 2, %s146
          %s149 = ssub.s32 128, 128
          %150 = vsyncadd %s142, %s149
          %s151 = smul.addr %s22, 2
          %s152 = sadd.s32 %s147, %s151
          %s153 = smul.addr %s152, 64
          %s154 = scalar_lea.hbm %s0, %s153
          %s156 = sshll.u32 %s145, 4
          %s157 = int_to_ptr.vmem [resolvable:$true] %s156
          %159 = dma.hbm_to_vmem [thread:$0]  %s154, 128, %s157, %s142
        $region20: #{tpu_custom_call.1} parent=15 // pred_fallthru
          _
        // Predicated region
        $region21: #{tpu_custom_call.1} parent=15 // pred_check
          %p160 = pneg %p87
        $region22: #{tpu_custom_call.1} parent=15 // pred_check_branch
          %162 = sbr.rel (%p160) target = $region24
        $region23: #{tpu_custom_call.1} parent=15 // pred_region
          %s163 = sand.u32 %s77, 1
          %s164 = scalar_lea.sflag [#allocation5], %s163
          %s165 = sand.u32 %s77, 1
          %s166 = smul.addr %s165, 2
          %s167 = scalar_lea.vmem [#allocation4], %s166
          %s168 = sadd.s32 %s21, %s23
          %s169 = smul.u32 2, %s168
          %s171 = ssub.s32 32, 32
          %172 = vsyncadd %s164, %s171
          %s173 = smul.addr %s22, 2
          %s174 = sadd.s32 %s169, %s173
          %s175 = smul.addr %s174, 16
          %s176 = scalar_lea.hbm %s1, %s175
          %s178 = sshll.u32 %s167, 4
          %s179 = int_to_ptr.vmem [resolvable:$true] %s178
          %181 = dma.hbm_to_vmem [thread:$0]  %s176, 32, %s179, %s164
        $region24: #{tpu_custom_call.1} parent=15 // pred_fallthru
          _
      $region16: #{tpu_custom_call.1} parent=5 // pred_fallthru
        _
      %p182 = scmp.le.s32.totalorder 1, %s14
      %p183 = scmp.lt.s32.totalorder %s14, 3
      %p184 = pnand %p182, %p183
      %p185 = pneg %p184
      // Predicated region
      $region25: #{tpu_custom_call.1} parent=5 // pred_check
        _
      $region26: #{tpu_custom_call.1} parent=5 // pred_check_branch
        %187 = sbr.rel (%p184) target = $region28
      $region27: #{tpu_custom_call.1} parent=5 // pred_region
        %s188 = ssub.s32 %s14, 1
        %s189 = sand.u32 %s50, 1
        %s190 = scalar_lea.sflag [#allocation3], %s189
        %s191 = sand.u32 %s50, 1
        %s192 = smul.addr %s191, 8
        %s193 = scalar_lea.vmem [#allocation2], %s192
        // Predicated region
        $region29: #{tpu_custom_call.1} parent=27 // pred_check
          %p194 = pneg %p63
        $region30: #{tpu_custom_call.1} parent=27 // pred_check_branch
          %196 = sbr.rel (%p194) target = $region32
        $region31: #{tpu_custom_call.1} parent=27 // pred_region
          %197 = dma.done %s190, 128
        $region32: #{tpu_custom_call.1} parent=27 // pred_fallthru
          _
        %s198 = sand.u32 %s80, 1
        %s199 = scalar_lea.sflag [#allocation5], %s198
        %s200 = sand.u32 %s80, 1
        %s201 = smul.addr %s200, 2
        %s202 = scalar_lea.vmem [#allocation4], %s201
        // Predicated region
        $region33: #{tpu_custom_call.1} parent=27 // pred_check
          %p203 = pneg %p93
        $region34: #{tpu_custom_call.1} parent=27 // pred_check_branch
          %205 = sbr.rel (%p203) target = $region36
        $region35: #{tpu_custom_call.1} parent=27 // pred_region
          %206 = dma.done %s199, 32
        $region36: #{tpu_custom_call.1} parent=27 // pred_fallthru
          _
        %s207 = sand.u32 %s50, 1
        %s208 = scalar_lea.sflag [#allocation3], %s207
        %s209 = sand.u32 %s50, 1
        %s210 = smul.addr %s209, 8
        %s211 = scalar_lea.vmem [#allocation2], %s210
        %p212 = pneg %p63
        %p213 = pneg %p60
        %s214 = sand.u32 %s80, 1
        %s215 = scalar_lea.sflag [#allocation5], %s214
        %s216 = sand.u32 %s80, 1
        %s217 = smul.addr %s216, 2
        %s218 = scalar_lea.vmem [#allocation4], %s217
        %p219 = pneg %p93
        %p220 = pneg %p90
        %p221 = pneg %p119
        %p222 = pneg %p116
        %p223 = scmp.lt.s32.totalorder %s24, 0
        %s224 = scalar_select %p223, %s24, 0
        %s225 = smul.addr %s224, 4
        %s226 = scalar_lea.vmem %s2, %s225
        %s227 = sadd.s32 %s24, %s26
        %s228 = smul.u32 2, %s227
        %s229 = sadd.s32 %s24, %s26
        %s230 = smul.u32 2, %s229
        %p231 = scmp.lt.s32.totalorder %s24, 0
        %s232 = scalar_select %p231, %s24, 0
        %s233 = smul.addr %s232, 4
        %s234 = scalar_lea.vmem %s2, %s233
        %p235 = scmp.eq.s32.totalorder %s25, 0
        %p236 = scmp.eq.s32.totalorder %s26, 0
        %p237 = pnand %p235, %p236
        %p238 = pneg %p237
        // Predicated region
        $region37: #{tpu_custom_call.1} parent=27 // pred_check
          _
        $region38: #{tpu_custom_call.1} parent=27 // pred_check_branch
          %240 = sbr.rel (%p237) target = $region40
        $region39: #{tpu_custom_call.1} parent=27 // pred_region
          %vm241 = vcmask 26624
          %242 = vst.msk [vmem:[%s234] sm:$0x7] %vm241, 0.0
        $region40: #{tpu_custom_call.1} parent=27 // pred_fallthru
          _
        %v243 = vld [vmem:[%s193] sm:$0xff]
        %v244 = vld [vmem:[%s202] sm:$0x3]
        %v245 = vlaneseq
        %v246 = vshrl.u32 %v245, 7
        %v247 = vlaneseq
        %v248 = vshrl.u32 %v247, 7
        %v249 = vsub.s32 0, %v248
        %v250 = vrot.slane %v244, %v249
        %v251 = vlaneseq
        %v252 = vshrl.u32 %v251, 7
        %v253 = vsub.s32 1, %v252
        %v254 = vrot.slane %v244, %v253
        %vm255 = vcmp.eq.s32.totalorder %v246, %v250
        %vm256 = vcmp.eq.s32.totalorder %v246, %v254
        %v257 = vsel %vm255, 1, 0
        %v258 = vsel %vm256, 1, 0
        %v259 = vcvt.s32.f32 %v257
        %v260 = vcvt.s32.f32 %v258
        %v263 = vcombine.low %v259, %v260
        %v265 = vmul.f32 %v243, %v263
        %v267 = vcombine.high %v265, %v265
        %vm269 = vcmask 1043456
        %v270 = vsel %vm269, %v265, 0.0
        %v271 = vsel %vm269, %v267, 0.0
        %v272 = vadd.f32 %v270, %v271
        %273 = vadd.xlane.f32.xlu0 %v272
        %v274 = vpop.xlane.xlu0 %273
        %v275 = vmul.f32 %v243, %v243
        %v277 = vcombine.high %v275, %v275
        %v279 = vsel %vm269, %v275, 0.0
        %v280 = vsel %vm269, %v277, 0.0
        %v281 = vadd.f32 %v279, %v280
        %282 = vadd.xlane.f32.xlu0 %v281
        %v283 = vpop.xlane.xlu0 %282
        %v284 = vsel %vm269, %v259, 0.0
        %v285 = vsel %vm269, %v260, 0.0
        %v286 = vadd.f32 %v284, %v285
        %287 = vadd.xlane.f32.xlu0 %v286
        %v288 = vpop.xlane.xlu0 %287
        %v289 = vld [vmem:[%s234] sm:$0x7]
        %v291 = vlaneseq
        %v292 = vand.u32 %v291, 127
        %v293 = vlaneseq
        %v294 = vshrl.u32 %v293, 7
        %v295 = vsub.s32 %v292, %v294
        %v296 = vrot.slane %v274, %v295
        %v299 = vlaneseq
        %v300 = vshrl.u32 %v299, 7
        %v301 = vsub.s32 %v292, %v300
        %v302 = vrot.slane %v283, %v301
        %v305 = vlaneseq
        %v306 = vshrl.u32 %v305, 7
        %v307 = vsub.s32 %v292, %v306
        %v308 = vrot.slane %v288, %v307
        %vm310 = vcmask 1040384
        %v311 = vsel %vm310, %v296, %v302
        %vm312 = vcmask 1041408
        %v313 = vsel %vm312, %v311, %v308
        %v314 = vadd.f32 %v289, %v313
        %vm315 = vcmask 26624
        %316 = vst.msk [vmem:[%s234] sm:$0x7] %vm315, %v314
        %p317 = scmp.lt.s32.totalorder %s24, 0
        %s318 = scalar_select %p317, %s24, 0
        %s319 = smul.addr %s318, 4
        %s320 = scalar_lea.vmem %s2, %s319
        // Predicated region
        $region41: #{tpu_custom_call.1} parent=27 // pred_check
          %p321 = pneg %p116
        $region42: #{tpu_custom_call.1} parent=27 // pred_check_branch
          %323 = sbr.rel (%p321) target = $region44
        $region43: #{tpu_custom_call.1} parent=27 // pred_region
          _
        $region44: #{tpu_custom_call.1} parent=27 // pred_fallthru
          _
        // Predicated region
        $region45: #{tpu_custom_call.1} parent=27 // pred_check
          %p324 = pneg %p116
        $region46: #{tpu_custom_call.1} parent=27 // pred_check_branch
          %326 = sbr.rel (%p324) target = $region48
        $region47: #{tpu_custom_call.1} parent=27 // pred_region
          %p327 = scmp.lt.s32.totalorder %s24, 0
          %s328 = scalar_select %p327, %s24, 0
          %s329 = smul.addr %s328, 4
          %s330 = scalar_lea.vmem %s2, %s329
        $region48: #{tpu_custom_call.1} parent=27 // pred_fallthru
          _
      $region28: #{tpu_custom_call.1} parent=5 // pred_fallthru
        _
      %p331 = scmp.le.s32.totalorder 2, %s14
      // Predicated region
      $region49: #{tpu_custom_call.1} parent=5 // pred_check
        %p332 = pneg %p331
      $region50: #{tpu_custom_call.1} parent=5 // pred_check_branch
        %334 = sbr.rel (%p332) target = $region52
      $region51: #{tpu_custom_call.1} parent=5 // pred_region
        %s335 = ssub.s32 %s14, 2
      $region52: #{tpu_custom_call.1} parent=5 // pred_fallthru
        _
    $region6: #{tpu_custom_call.1} parent=1 // loop_footer
      %s18 = sadd.s32 1, %s14
    $region7: #{tpu_custom_call.1} parent=1 // loop_footer_branch
      %13 = sbr.rel target = $region3
    $region8: #{tpu_custom_call.1} parent=1 // loop_exit
      _
    %336 = vsyncpa [#allocation3], 1
    %s337 = scalar_lea.sflag [#allocation3], 1
    %338 = vsyncpa %s337, 1
    %339 = vsyncpa [#allocation5], 1
    %s340 = scalar_lea.sflag [#allocation5], 1
    %341 = vsyncpa %s340, 1

</llo_original>
